<compile_context>
chip_gen: v7x
topology: tpu7x:2x2x1
jax: 0.10.0
libtpu: 0.0.40
codegen_flags: <defaults>
</compile_context>

<pallas_src>
import functools
import math

import numpy as np
import jax
import jax.numpy as jnp
from jax import lax
from jax.experimental import pallas as pl
from jax.experimental.pallas import tpu as pltpu

LOG2 = math.log(2.0)
LANE = 128
SUB = 8


def _round_up(x, m):
    return ((x + m - 1) // m) * m


def _scalar_mlp_kernel(x_ref, *refs, num_linear, act_last):
    """Fused ScalarMLP forward on one (tile, in_size) row tile.

    refs = (w0, b0, w1, b1, ..., w_last_T, b_last, out_ref).
    Layers 0..L-2 use torch-layout weights (out,in) and biases (out,1) and keep the
    activations feature-major (features, tile) -> lane-dense softplus.  The last
    layer uses a pre-transposed weight (in,out) and bias (1,out) and flips back to
    row-major (tile, out) for a single store.  Hidden softplus omits "-log2"
    (folded into the next bias in the wrapper).
    """
    out_ref = refs[-1]
    L = num_linear
    x = x_ref[...]                                            # (tile, in)

    if L == 1:
        w_t = refs[0][...]                                    # (in, out)
        b = refs[1][...]                                      # (1, out)
        h = lax.dot_general(x, w_t, (((1,), (0,)), ((), ())),
                            preferred_element_type=jnp.float32) + b
    else:
        # First layer: (d1, tile) = W0 @ x^T  (q @ k.T -style contraction).
        w0 = refs[0][...]                                     # (d1, in)
        b0 = refs[1][...]                                     # (d1, 1)
        h = lax.dot_general(w0, x, (((1,), (1,)), ((), ())),
                            preferred_element_type=jnp.float32) + b0
        h = jnp.logaddexp(h, 0.0)                             # softplus; -log2 folded ahead

        # Middle layers: standard (d_next, d_cur) x (d_cur, tile) matmuls.
        for li in range(1, L - 1):
            w = refs[2 * li][...]                             # (d_next, d_cur)
            b = refs[2 * li + 1][...]                         # (d_next, 1)
            h = lax.dot_general(w, h, (((1,), (0,)), ((), ())),
                                preferred_element_type=jnp.float32) + b
            h = jnp.logaddexp(h, 0.0)

        # Last layer: flip to row-major (tile, d_out) via (0,0)-contraction.
        w_t = refs[2 * (L - 1)][...]                          # (d_prev, d_out)
        b = refs[2 * (L - 1) + 1][...]                        # (1, d_out)
        h = lax.dot_general(h, w_t, (((0,), (0,)), ((), ())),
                            preferred_element_type=jnp.float32) + b

    if act_last:                                              # net ends in ssp
        h = jnp.logaddexp(h, 0.0) - LOG2
    out_ref[...] = h.astype(out_ref.dtype)


def scalar_mlp(x, weights, biases, *, has_out_layer=True, max_tile=16384):
    """ScalarMLP forward (batch_norm=False).

    x:       (N, in_size) float32
    weights: list of torch-layout Linear weights, each (out_features, in_features)
    biases:  list of biases, each (out_features,)
    has_out_layer: if True, the last Linear gets no activation (ScalarMLP out layer).
    """
    N, in_size = x.shape
    L = len(weights)
    out_size = weights[-1].shape[0]

    # Exact fold of ShiftedSoftPlus' "-log2" into the following layer's bias.
    b_eff = [biases[0]] + [biases[i] - LOG2 * weights[i].sum(axis=1) for i in range(1, L)]

    # --- Row-tile selection with explicit VMEM accounting ------------------------
    # Per-row VMEM: double-buffered in/out blocks (lane-padded to 128) + live
    # feature-major activations (no lane padding).  Budget keeps the worst case
    # comfortably inside v7x's 64 MiB physical VMEM; tile also capped so the grid
    # has >= 4 steps (>= 2 per v7x core) whenever N is large enough.
    row_bytes = 2 * 4 * (_round_up(in_size, LANE) + _round_up(out_size, LANE))
    row_bytes += 4 * sum(_round_up(w.shape[0], SUB) for w in weights)
    budget = 28 << 20
    tile_cap = max(SUB, min(int(max_tile), (budget // row_bytes) // SUB * SUB))
    tile = max(SUB, min(tile_cap, _round_up(pl.cdiv(N, 4), SUB)))
    grid = pl.cdiv(N, tile)        # ragged tail handled by Pallas masked boundary block

    const_bytes = 2 * 4 * sum(
        _round_up(w.shape[0], SUB) * _round_up(w.shape[1], LANE) + LANE for w in weights)
    vmem_limit = int(min(56 << 20, max(16 << 20, tile * row_bytes + const_bytes + (2 << 20))))

    # --- Operands & BlockSpecs ----------------------------------------------------
    operands = [x]
    in_specs = [pl.BlockSpec((tile, in_size), lambda i: (i, 0))]
    for li, (w, b) in enumerate(zip(weights, b_eff)):
        d_out, d_in = w.shape
        last = li == L - 1
        w_arg = w.T if last else w                    # only the tiny last weight transposed
        b_arg = b.reshape(1, d_out) if last else b.reshape(d_out, 1)
        operands += [w_arg, b_arg]
        in_specs += [
            pl.BlockSpec(tuple(w_arg.shape), lambda i: (0, 0)),   # VMEM-resident weight
            pl.BlockSpec(tuple(b_arg.shape), lambda i: (0, 0)),   # VMEM-resident bias
        ]

    kernel = functools.partial(_scalar_mlp_kernel, num_linear=L,
                               act_last=not has_out_layer)

    return pl.pallas_call(
        kernel,
        out_shape=jax.ShapeDtypeStruct((N, out_size), jnp.float32),
        grid_spec=pltpu.PrefetchScalarGridSpec(
            num_scalar_prefetch=0,
            grid=(grid,),
            in_specs=in_specs,
            out_specs=pl.BlockSpec((tile, out_size), lambda i: (i, 0)),
        ),
        compiler_params=pltpu.CompilerParams(
            dimension_semantics=("parallel",),
            vmem_limit_bytes=vmem_limit),
    )(*operands)


def scalar_mlp_reference(x, weights, biases, *, has_out_layer=True):
    """Pure-JAX reference of the same forward (torch Linear + ShiftedSoftPlus)."""
    h = x
    n = len(weights)
    for li, (w, b) in enumerate(zip(weights, biases)):
        h = h @ w.T + b
        if li < n - 1 or not has_out_layer:
            h = jnp.logaddexp(h, 0.0) - LOG2
    return h


if __name__ == "__main__":
    # ScalarMLP(in_size=16, hidden_sizes=[32, 32], out_size=8, out_bias=True)
    in_size, hidden_sizes, out_size = 16, [32, 32], 8
    N = 200  # deliberately not a multiple of the tile -> exercises the ragged tail block

    key = jax.random.PRNGKey(0)
    sizes = [in_size] + hidden_sizes + [out_size]
    keys = jax.random.split(key, 1 + 2 * (len(sizes) - 1))

    x = jax.random.normal(keys[0], (N, in_size), jnp.float32)
    weights, biases = [], []
    for li, (d_in, d_out) in enumerate(zip(sizes[:-1], sizes[1:])):
        # torch.nn.Linear default init: U(-1/sqrt(fan_in), 1/sqrt(fan_in))
        bound = 1.0 / math.sqrt(d_in)
        weights.append(jax.random.uniform(
            keys[1 + 2 * li], (d_out, d_in), jnp.float32, -bound, bound))
        biases.append(jax.random.uniform(
            keys[2 + 2 * li], (d_out,), jnp.float32, -bound, bound))

    out = jax.block_until_ready(
        scalar_mlp(x, weights, biases, has_out_layer=True))
    ref = scalar_mlp_reference(x, weights, biases, has_out_layer=True)

    assert out.shape == (N, out_size) and out.dtype == jnp.float32
    np.testing.assert_allclose(np.asarray(out), np.asarray(ref), rtol=5e-5, atol=5e-5)
    print("KERNEL_OK")
</pallas_src>

<mosaic_0001>
module attributes {stable_mosaic.version = 11 : i64} {
  func.func @_scalar_mlp_kernel(%arg0: i32, %arg1: memref<56x16xf32, #tpu.memory_space<vmem>>, %arg2: memref<32x16xf32, #tpu.memory_space<vmem>>, %arg3: memref<32x1xf32, #tpu.memory_space<vmem>>, %arg4: memref<32x32xf32, #tpu.memory_space<vmem>>, %arg5: memref<32x1xf32, #tpu.memory_space<vmem>>, %arg6: memref<32x8xf32, #tpu.memory_space<vmem>>, %arg7: memref<1x8xf32, #tpu.memory_space<vmem>>, %arg8: memref<56x8xf32, #tpu.memory_space<vmem>>) attributes {dimension_semantics = [#tpu.dimension_semantics<parallel>], iteration_bounds = array<i64: 4>, scalar_prefetch = 0 : i64, scratch_operands = 0 : i64, tpu.core_type = #tpu.core_type<tc>, window_params = [{transform_indices = @transform_0, window_bounds = array<i64: 56, 16>}, {pipeline_mode = #tpu.pipeline_mode<synchronous>, transform_indices = @transform_1, window_bounds = array<i64: 32, 16>}, {pipeline_mode = #tpu.pipeline_mode<synchronous>, transform_indices = @transform_2, window_bounds = array<i64: 32, 1>}, {pipeline_mode = #tpu.pipeline_mode<synchronous>, transform_indices = @transform_3, window_bounds = array<i64: 32, 32>}, {pipeline_mode = #tpu.pipeline_mode<synchronous>, transform_indices = @transform_4, window_bounds = array<i64: 32, 1>}, {pipeline_mode = #tpu.pipeline_mode<synchronous>, transform_indices = @transform_5, window_bounds = array<i64: 32, 8>}, {pipeline_mode = #tpu.pipeline_mode<synchronous>, transform_indices = @transform_6, window_bounds = array<i64: 1, 8>}, {transform_indices = @transform_7, window_bounds = array<i64: 56, 8>}]} {
    %c0 = arith.constant 0 : index
    %c0_0 = arith.constant 0 : index
    %0 = vector.load %arg1[%c0, %c0_0] : memref<56x16xf32, #tpu.memory_space<vmem>>, vector<56x16xf32>
    %c0_1 = arith.constant 0 : index
    %c0_2 = arith.constant 0 : index
    %1 = vector.load %arg2[%c0_1, %c0_2] : memref<32x16xf32, #tpu.memory_space<vmem>>, vector<32x16xf32>
    %c0_3 = arith.constant 0 : index
    %c0_4 = arith.constant 0 : index
    %2 = vector.load %arg3[%c0_3, %c0_4] : memref<32x1xf32, #tpu.memory_space<vmem>>, vector<32x1xf32>
    %cst = arith.constant dense<0.000000e+00> : vector<32x56xf32>
    %3 = tpu.matmul %1, %0, %cst {dimension_numbers = #tpu.dot_dimension_numbers<[1], [1], [0], [0], [0, 0, 1, 0], [], []>} : vector<32x16xf32>, vector<56x16xf32>, vector<32x56xf32> -> vector<32x56xf32>
    %4 = vector.broadcast %2 : vector<32x1xf32> to vector<32x56xf32>
    %5 = arith.addf %3, %4 : vector<32x56xf32>
    %cst_5 = arith.constant 0.000000e+00 : f32
    %6 = vector.broadcast %cst_5 : f32 to vector<32x56xf32>
    %7 = arith.maximumf %5, %6 : vector<32x56xf32>
    %8 = vector.broadcast %cst_5 : f32 to vector<32x56xf32>
    %9 = arith.subf %5, %8 : vector<32x56xf32>
    %10 = arith.cmpf one, %9, %9 : vector<32x56xf32>
    %11 = vector.broadcast %cst_5 : f32 to vector<32x56xf32>
    %12 = arith.addf %5, %11 : vector<32x56xf32>
    %13 = math.absf %9 : vector<32x56xf32>
    %cst_6 = arith.constant 0.000000e+00 : f32
    %14 = vector.broadcast %cst_6 : f32 to vector<32x56xf32>
    %15 = arith.subf %14, %13 : vector<32x56xf32>
    %16 = math.exp %15 : vector<32x56xf32>
    %17 = math.log1p %16 : vector<32x56xf32>
    %18 = arith.addf %7, %17 : vector<32x56xf32>
    %19 = arith.select %10, %12, %18 : vector<32x56xi1>, vector<32x56xf32>
    %c0_7 = arith.constant 0 : index
    %c0_8 = arith.constant 0 : index
    %20 = vector.load %arg4[%c0_7, %c0_8] : memref<32x32xf32, #tpu.memory_space<vmem>>, vector<32x32xf32>
    %c0_9 = arith.constant 0 : index
    %c0_10 = arith.constant 0 : index
    %21 = vector.load %arg5[%c0_9, %c0_10] : memref<32x1xf32, #tpu.memory_space<vmem>>, vector<32x1xf32>
    %cst_11 = arith.constant dense<0.000000e+00> : vector<32x56xf32>
    %22 = tpu.matmul %20, %19, %cst_11 {dimension_numbers = #tpu.dot_dimension_numbers<[1], [0], [0], [1], [0, 0, 1, 1], [], []>} : vector<32x32xf32>, vector<32x56xf32>, vector<32x56xf32> -> vector<32x56xf32>
    %23 = vector.broadcast %21 : vector<32x1xf32> to vector<32x56xf32>
    %24 = arith.addf %22, %23 : vector<32x56xf32>
    %cst_12 = arith.constant 0.000000e+00 : f32
    %25 = vector.broadcast %cst_12 : f32 to vector<32x56xf32>
    %26 = arith.maximumf %24, %25 : vector<32x56xf32>
    %27 = vector.broadcast %cst_12 : f32 to vector<32x56xf32>
    %28 = arith.subf %24, %27 : vector<32x56xf32>
    %29 = arith.cmpf one, %28, %28 : vector<32x56xf32>
    %30 = vector.broadcast %cst_12 : f32 to vector<32x56xf32>
    %31 = arith.addf %24, %30 : vector<32x56xf32>
    %32 = math.absf %28 : vector<32x56xf32>
    %cst_13 = arith.constant 0.000000e+00 : f32
    %33 = vector.broadcast %cst_13 : f32 to vector<32x56xf32>
    %34 = arith.subf %33, %32 : vector<32x56xf32>
    %35 = math.exp %34 : vector<32x56xf32>
    %36 = math.log1p %35 : vector<32x56xf32>
    %37 = arith.addf %26, %36 : vector<32x56xf32>
    %38 = arith.select %29, %31, %37 : vector<32x56xi1>, vector<32x56xf32>
    %c0_14 = arith.constant 0 : index
    %c0_15 = arith.constant 0 : index
    %39 = vector.load %arg6[%c0_14, %c0_15] : memref<32x8xf32, #tpu.memory_space<vmem>>, vector<32x8xf32>
    %c0_16 = arith.constant 0 : index
    %c0_17 = arith.constant 0 : index
    %40 = vector.load %arg7[%c0_16, %c0_17] : memref<1x8xf32, #tpu.memory_space<vmem>>, vector<1x8xf32>
    %cst_18 = arith.constant dense<0.000000e+00> : vector<56x8xf32>
    %41 = tpu.matmul %38, %39, %cst_18 {dimension_numbers = #tpu.dot_dimension_numbers<[0], [0], [1], [1], [0, 1, 1, 1], [], []>} : vector<32x56xf32>, vector<32x8xf32>, vector<56x8xf32> -> vector<56x8xf32>
    %42 = vector.broadcast %40 : vector<1x8xf32> to vector<56x8xf32>
    %43 = arith.addf %41, %42 : vector<56x8xf32>
    %c0_19 = arith.constant 0 : index
    %c0_20 = arith.constant 0 : index
    %44 = vector.load %arg8[%c0_19, %c0_20] : memref<56x8xf32, #tpu.memory_space<vmem>>, vector<56x8xf32>
    tpu.vector_store %arg8[%c0_19, %c0_20], %43 {strides = array<i32>} : memref<56x8xf32, #tpu.memory_space<vmem>>, vector<56x8xf32>,
    return
  }
  func.func @transform_0(%arg0: i32) -> (i32, i32) {
    %c0_i32 = arith.constant 0 : i32
    %c0_i32_0 = arith.constant 0 : i32
    return %arg0, %c0_i32 : i32, i32
  }
  func.func @transform_1(%arg0: i32) -> (i32, i32) {
    %c0_i32 = arith.constant 0 : i32
    %c0_i32_0 = arith.constant 0 : i32
    %c0_i32_1 = arith.constant 0 : i32
    return %c0_i32, %c0_i32_0 : i32, i32
  }
  func.func @transform_2(%arg0: i32) -> (i32, i32) {
    %c0_i32 = arith.constant 0 : i32
    %c0_i32_0 = arith.constant 0 : i32
    %c0_i32_1 = arith.constant 0 : i32
    return %c0_i32, %c0_i32_0 : i32, i32
  }
  func.func @transform_3(%arg0: i32) -> (i32, i32) {
    %c0_i32 = arith.constant 0 : i32
    %c0_i32_0 = arith.constant 0 : i32
    %c0_i32_1 = arith.constant 0 : i32
    return %c0_i32, %c0_i32_0 : i32, i32
  }
  func.func @transform_4(%arg0: i32) -> (i32, i32) {
    %c0_i32 = arith.constant 0 : i32
    %c0_i32_0 = arith.constant 0 : i32
    %c0_i32_1 = arith.constant 0 : i32
    return %c0_i32, %c0_i32_0 : i32, i32
  }
  func.func @transform_5(%arg0: i32) -> (i32, i32) {
    %c0_i32 = arith.constant 0 : i32
    %c0_i32_0 = arith.constant 0 : i32
    %c0_i32_1 = arith.constant 0 : i32
    return %c0_i32, %c0_i32_0 : i32, i32
  }
  func.func @transform_6(%arg0: i32) -> (i32, i32) {
    %c0_i32 = arith.constant 0 : i32
    %c0_i32_0 = arith.constant 0 : i32
    %c0_i32_1 = arith.constant 0 : i32
    return %c0_i32, %c0_i32_0 : i32, i32
  }
  func.func @transform_7(%arg0: i32) -> (i32, i32) {
    %c0_i32 = arith.constant 0 : i32
    %c0_i32_0 = arith.constant 0 : i32
    return %arg0, %c0_i32 : i32, i32
  }
}

</mosaic_0001>

<llo_original>
// kernel: tpu_custom_call.1
$region0: #{tpu_custom_call.1}
  #allocation0 [shape = 'u32[]', space=smem, size = 0x4, offset = 0x4, fixed_abs, tag = 'smem constant byte address 0x4 - core index']
  #allocation1 [shape = 'u32[144,128]{1,0:T(1,128)}', space=vmem, size = 0x12000, scoped, tag = 'internal scratch']
  %s0 = inlined_call_operand.vmem [shape: f32[200,16], index: 0, kind: input, shape index: {}]
  %s1 = inlined_call_operand.vmem [shape: f32[32,16], index: 1, kind: input, shape index: {}]
  %s2 = inlined_call_operand.vmem [shape: f32[32,1], index: 2, kind: input, shape index: {}]
  %s3 = inlined_call_operand.vmem [shape: f32[32,32], index: 3, kind: input, shape index: {}]
  %s4 = inlined_call_operand.vmem [shape: f32[32,1], index: 4, kind: input, shape index: {}]
  %s5 = inlined_call_operand.vmem [shape: f32[32,8], index: 5, kind: input, shape index: {}]
  %s6 = inlined_call_operand.vmem [shape: f32[1,8], index: 6, kind: input, shape index: {}]
  %s7 = inlined_call_operand.vmem [shape: f32[200,8], index: 7, kind: output, shape index: {}]
  %s8 = sld [smem:[#allocation0]]
  $region109: #{tpu_custom_call.1} parent=0
    _
  %s10 = ssub.s32 1, %s8
  %s11 = scalar_select 0, %s10, %s8
  $region1: #{tpu_custom_call.1} parent=0
    #allocation2 [shape = 'u8[57344]{0}', space=vmem, size = 0xe000, scoped, tag = 'output window, operand 0']
    loop: start=0, step=1, limit=6
    $region2: #{tpu_custom_call.1} parent=1 // loop_pre_header
      _
    $region3: #{tpu_custom_call.1} parent=1 // loop_header
      %s13 = sphi 0, %s17
      %p14 = scmp.ge.s32.totalorder %s13, 6
      %s23 = sphi 0, %s25
      %s26 = sphi 0, %s23
      %s27 = sphi 0, %s26
      %s43 = sphi 0, %s27
      %s47 = sphi 0, %s47
      %s49 = sphi 0, %s47
      %s50 = sphi 0, %s49
      %s64 = sphi 0, %s50
      %s68 = sphi 0, %s68
      %s70 = sphi 0, %s68
      %s71 = sphi 0, %s70
      %s85 = sphi 0, %s71
      %s89 = sphi 0, %s89
      %s91 = sphi 0, %s89
      %s92 = sphi 0, %s91
      %s106 = sphi 0, %s92
      %s110 = sphi 0, %s110
      %s112 = sphi 0, %s110
      %s113 = sphi 0, %s112
      %s127 = sphi 0, %s113
      %s131 = sphi 0, %s131
      %s133 = sphi 0, %s131
      %s134 = sphi 0, %s133
      %s148 = sphi 0, %s134
      %s152 = sphi 0, %s152
      %s154 = sphi 0, %s152
      %s155 = sphi 0, %s154
      %s169 = sphi 0, %s155
      %s175 = sphi 0, %s177
      %s178 = sphi 0, %s175
      %s179 = sphi 0, %s178
      %s195 = sphi 0, %s179
    $region4: #{tpu_custom_call.1} parent=1 // loop_header_branch
      %16 = sbr.rel (%p14) target = $region8
    $region5: #{tpu_custom_call.1} parent=1 // loop_body
      %s18 = ssub.s32 %s13, 1
      %s19 = ssub.s32 %s13, 2
      %s20 = sadd.s32 %s13, 1
      %s21 = ssub.s32 %s13, %s20
      %p22 = scmp.eq.s32.totalorder %s21, 0
      %s24 = sadd.s32 %s23, 1
      %s25 = scalar_select %p22, %s23, %s24
      %p28 = pneg %p22
      %p29 = scmp.eq.s32.totalorder %s13, 3
      %p30 = por %p28, %p29
      %p31 = scmp.ne.s32.totalorder %s23, %s26
      %p32 = scmp.eq.s32.totalorder %s13, 0
      %p33 = por %p31, %p32
      %p34 = scmp.ne.s32.totalorder %s23, %s26
      %p35 = scmp.eq.s32.totalorder %s18, 3
      %p36 = por %p34, %p35
      %p37 = scmp.ne.s32.totalorder %s26, %s27
      %p38 = scmp.eq.s32.totalorder %s18, 0
      %p39 = por %p37, %p38
      %p40 = scmp.ne.s32.totalorder %s26, %s27
      %p41 = scmp.eq.s32.totalorder %s19, 3
      %p42 = por %p40, %p41
      %p44 = scmp.ne.s32.totalorder %s27, %s43
      %p45 = scmp.eq.s32.totalorder %s19, 0
      %p46 = por %p44, %p45
      %s48 = sadd.s32 %s47, 1
      %p51 = scmp.eq.s32.totalorder %s13, 3
      %p52 = scmp.ne.s32.totalorder %s47, %s49
      %p53 = scmp.eq.s32.totalorder %s13, 0
      %p54 = por %p52, %p53
      %p55 = scmp.ne.s32.totalorder %s47, %s49
      %p56 = scmp.eq.s32.totalorder %s18, 3
      %p57 = por %p55, %p56
      %p58 = scmp.ne.s32.totalorder %s49, %s50
      %p59 = scmp.eq.s32.totalorder %s18, 0
      %p60 = por %p58, %p59
      %p61 = scmp.ne.s32.totalorder %s49, %s50
      %p62 = scmp.eq.s32.totalorder %s19, 3
      %p63 = por %p61, %p62
      %p65 = scmp.ne.s32.totalorder %s50, %s64
      %p66 = scmp.eq.s32.totalorder %s19, 0
      %p67 = por %p65, %p66
      %s69 = sadd.s32 %s68, 1
      %p72 = scmp.eq.s32.totalorder %s13, 3
      %p73 = scmp.ne.s32.totalorder %s68, %s70
      %p74 = scmp.eq.s32.totalorder %s13, 0
      %p75 = por %p73, %p74
      %p76 = scmp.ne.s32.totalorder %s68, %s70
      %p77 = scmp.eq.s32.totalorder %s18, 3
      %p78 = por %p76, %p77
      %p79 = scmp.ne.s32.totalorder %s70, %s71
      %p80 = scmp.eq.s32.totalorder %s18, 0
      %p81 = por %p79, %p80
      %p82 = scmp.ne.s32.totalorder %s70, %s71
      %p83 = scmp.eq.s32.totalorder %s19, 3
      %p84 = por %p82, %p83
      %p86 = scmp.ne.s32.totalorder %s71, %s85
      %p87 = scmp.eq.s32.totalorder %s19, 0
      %p88 = por %p86, %p87
      %s90 = sadd.s32 %s89, 1
      %p93 = scmp.eq.s32.totalorder %s13, 3
      %p94 = scmp.ne.s32.totalorder %s89, %s91
      %p95 = scmp.eq.s32.totalorder %s13, 0
      %p96 = por %p94, %p95
      %p97 = scmp.ne.s32.totalorder %s89, %s91
      %p98 = scmp.eq.s32.totalorder %s18, 3
      %p99 = por %p97, %p98
      %p100 = scmp.ne.s32.totalorder %s91, %s92
      %p101 = scmp.eq.s32.totalorder %s18, 0
      %p102 = por %p100, %p101
      %p103 = scmp.ne.s32.totalorder %s91, %s92
      %p104 = scmp.eq.s32.totalorder %s19, 3
      %p105 = por %p103, %p104
      %p107 = scmp.ne.s32.totalorder %s92, %s106
      %p108 = scmp.eq.s32.totalorder %s19, 0
      %p109 = por %p107, %p108
      %s111 = sadd.s32 %s110, 1
      %p114 = scmp.eq.s32.totalorder %s13, 3
      %p115 = scmp.ne.s32.totalorder %s110, %s112
      %p116 = scmp.eq.s32.totalorder %s13, 0
      %p117 = por %p115, %p116
      %p118 = scmp.ne.s32.totalorder %s110, %s112
      %p119 = scmp.eq.s32.totalorder %s18, 3
      %p120 = por %p118, %p119
      %p121 = scmp.ne.s32.totalorder %s112, %s113
      %p122 = scmp.eq.s32.totalorder %s18, 0
      %p123 = por %p121, %p122
      %p124 = scmp.ne.s32.totalorder %s112, %s113
      %p125 = scmp.eq.s32.totalorder %s19, 3
      %p126 = por %p124, %p125
      %p128 = scmp.ne.s32.totalorder %s113, %s127
      %p129 = scmp.eq.s32.totalorder %s19, 0
      %p130 = por %p128, %p129
      %s132 = sadd.s32 %s131, 1
      %p135 = scmp.eq.s32.totalorder %s13, 3
      %p136 = scmp.ne.s32.totalorder %s131, %s133
      %p137 = scmp.eq.s32.totalorder %s13, 0
      %p138 = por %p136, %p137
      %p139 = scmp.ne.s32.totalorder %s131, %s133
      %p140 = scmp.eq.s32.totalorder %s18, 3
      %p141 = por %p139, %p140
      %p142 = scmp.ne.s32.totalorder %s133, %s134
      %p143 = scmp.eq.s32.totalorder %s18, 0
      %p144 = por %p142, %p143
      %p145 = scmp.ne.s32.totalorder %s133, %s134
      %p146 = scmp.eq.s32.totalorder %s19, 3
      %p147 = por %p145, %p146
      %p149 = scmp.ne.s32.totalorder %s134, %s148
      %p150 = scmp.eq.s32.totalorder %s19, 0
      %p151 = por %p149, %p150
      %s153 = sadd.s32 %s152, 1
      %p156 = scmp.eq.s32.totalorder %s13, 3
      %p157 = scmp.ne.s32.totalorder %s152, %s154
      %p158 = scmp.eq.s32.totalorder %s13, 0
      %p159 = por %p157, %p158
      %p160 = scmp.ne.s32.totalorder %s152, %s154
      %p161 = scmp.eq.s32.totalorder %s18, 3
      %p162 = por %p160, %p161
      %p163 = scmp.ne.s32.totalorder %s154, %s155
      %p164 = scmp.eq.s32.totalorder %s18, 0
      %p165 = por %p163, %p164
      %p166 = scmp.ne.s32.totalorder %s154, %s155
      %p167 = scmp.eq.s32.totalorder %s19, 3
      %p168 = por %p166, %p167
      %p170 = scmp.ne.s32.totalorder %s155, %s169
      %p171 = scmp.eq.s32.totalorder %s19, 0
      %p172 = por %p170, %p171
      %s173 = ssub.s32 %s13, %s20
      %p174 = scmp.eq.s32.totalorder %s173, 0
      %s176 = sadd.s32 %s175, 1
      %s177 = scalar_select %p174, %s175, %s176
      %p180 = pneg %p174
      %p181 = scmp.eq.s32.totalorder %s13, 3
      %p182 = por %p180, %p181
      %p183 = scmp.ne.s32.totalorder %s175, %s178
      %p184 = scmp.eq.s32.totalorder %s13, 0
      %p185 = por %p183, %p184
      %p186 = scmp.ne.s32.totalorder %s175, %s178
      %p187 = scmp.eq.s32.totalorder %s18, 3
      %p188 = por %p186, %p187
      %p189 = scmp.ne.s32.totalorder %s178, %s179
      %p190 = scmp.eq.s32.totalorder %s18, 0
      %p191 = por %p189, %p190
      %p192 = scmp.ne.s32.totalorder %s178, %s179
      %p193 = scmp.eq.s32.totalorder %s19, 3
      %p194 = por %p192, %p193
      %p196 = scmp.ne.s32.totalorder %s179, %s195
      %p197 = scmp.eq.s32.totalorder %s19, 0
      %p198 = por %p196, %p197
      %p199 = scmp.le.s32.totalorder 1, %s13
      %p200 = scmp.lt.s32.totalorder %s13, 5
      %p201 = pnand %p199, %p200
      %p202 = pneg %p201
      // Predicated region
      $region9: #{tpu_custom_call.1} parent=5 // pred_check
        _
      $region10: #{tpu_custom_call.1} parent=5 // pred_check_branch
        %204 = sbr.rel (%p201) target = $region12
      $region11: #{tpu_custom_call.1} parent=5 // pred_region
        %s205 = ssub.s32 %s13, 1
        // Predicated region
        $region13: #{tpu_custom_call.1} parent=11 // pred_check
          %p206 = pneg %p60
        $region14: #{tpu_custom_call.1} parent=11 // pred_check_branch
          %208 = sbr.rel (%p206) target = $region16
        $region15: #{tpu_custom_call.1} parent=11 // pred_region
          _
        $region16: #{tpu_custom_call.1} parent=11 // pred_fallthru
          _
        // Predicated region
        $region17: #{tpu_custom_call.1} parent=11 // pred_check
          %p209 = pneg %p81
        $region18: #{tpu_custom_call.1} parent=11 // pred_check_branch
          %211 = sbr.rel (%p209) target = $region20
        $region19: #{tpu_custom_call.1} parent=11 // pred_region
          _
        $region20: #{tpu_custom_call.1} parent=11 // pred_fallthru
          _
        // Predicated region
        $region21: #{tpu_custom_call.1} parent=11 // pred_check
          %p212 = pneg %p102
        $region22: #{tpu_custom_call.1} parent=11 // pred_check_branch
          %214 = sbr.rel (%p212) target = $region24
        $region23: #{tpu_custom_call.1} parent=11 // pred_region
          _
        $region24: #{tpu_custom_call.1} parent=11 // pred_fallthru
          _
        // Predicated region
        $region25: #{tpu_custom_call.1} parent=11 // pred_check
          %p215 = pneg %p123
        $region26: #{tpu_custom_call.1} parent=11 // pred_check_branch
          %217 = sbr.rel (%p215) target = $region28
        $region27: #{tpu_custom_call.1} parent=11 // pred_region
          _
        $region28: #{tpu_custom_call.1} parent=11 // pred_fallthru
          _
        // Predicated region
        $region29: #{tpu_custom_call.1} parent=11 // pred_check
          %p218 = pneg %p144
        $region30: #{tpu_custom_call.1} parent=11 // pred_check_branch
          %220 = sbr.rel (%p218) target = $region32
        $region31: #{tpu_custom_call.1} parent=11 // pred_region
          _
        $region32: #{tpu_custom_call.1} parent=11 // pred_fallthru
          _
        // Predicated region
        $region33: #{tpu_custom_call.1} parent=11 // pred_check
          %p221 = pneg %p165
        $region34: #{tpu_custom_call.1} parent=11 // pred_check_branch
          %223 = sbr.rel (%p221) target = $region36
        $region35: #{tpu_custom_call.1} parent=11 // pred_region
          _
        $region36: #{tpu_custom_call.1} parent=11 // pred_fallthru
          _
      $region12: #{tpu_custom_call.1} parent=5 // pred_fallthru
        _
      %p224 = scmp.lt.s32.totalorder %s13, 4
      // Predicated region
      $region37: #{tpu_custom_call.1} parent=5 // pred_check
        %p225 = pneg %p224
      $region38: #{tpu_custom_call.1} parent=5 // pred_check_branch
        %227 = sbr.rel (%p225) target = $region40
      $region39: #{tpu_custom_call.1} parent=5 // pred_region
        // Predicated region
        $region41: #{tpu_custom_call.1} parent=39 // pred_check
          %p228 = pneg %p33
        $region42: #{tpu_custom_call.1} parent=39 // pred_check_branch
          %230 = sbr.rel (%p228) target = $region44
        $region43: #{tpu_custom_call.1} parent=39 // pred_region
          %s231 = smul.u32 7, %s13
          %s232 = ssub.s32 25, %s231
          %p233 = scmp.lt.s32.totalorder %s232, 7
          %s234 = scalar_select %p233, %s232, 7
          %s235 = smul.u32 128, %s234
          %p236 = scmp.lt.s32.totalorder %s231, 24
          %s237 = scalar_select %p236, %s231, 24
          %s238 = smul.addr %s237, 8
          %s239 = scalar_lea.vmem %s0, %s238
          %s240 = smul.u32 7, %s13
          %s241 = ssub.s32 25, %s240
          %p242 = scmp.lt.s32.totalorder %s241, 7
          %s243 = scalar_select %p242, %s241, 7
          %s244 = smul.u32 128, %s243
        $region44: #{tpu_custom_call.1} parent=39 // pred_fallthru
          _
      $region40: #{tpu_custom_call.1} parent=5 // pred_fallthru
        _
      %p245 = scmp.le.s32.totalorder 1, %s13
      %p246 = scmp.lt.s32.totalorder %s13, 5
      %p247 = pnand %p245, %p246
      %p248 = pneg %p247
      // Predicated region
      $region45: #{tpu_custom_call.1} parent=5 // pred_check
        _
      $region46: #{tpu_custom_call.1} parent=5 // pred_check_branch
        %250 = sbr.rel (%p247) target = $region48
      $region47: #{tpu_custom_call.1} parent=5 // pred_region
        %s251 = ssub.s32 %s13, 1
        %s252 = smul.u32 7, %s18
        %s253 = ssub.s32 25, %s252
        %p254 = scmp.lt.s32.totalorder %s253, 7
        %s255 = scalar_select %p254, %s253, 7
        %s256 = smul.u32 128, %s255
        %p257 = scmp.lt.s32.totalorder %s252, 24
        %s258 = scalar_select %p257, %s252, 24
        %s259 = smul.addr %s258, 8
        %s260 = scalar_lea.vmem %s0, %s259
        %p261 = pneg %p39
        %p262 = pneg %p36
        %p263 = pneg %p60
        %p264 = pneg %p57
        %p265 = pneg %p81
        %p266 = pneg %p78
        %p267 = pneg %p102
        %p268 = pneg %p99
        %p269 = pneg %p123
        %p270 = pneg %p120
        %p271 = pneg %p144
        %p272 = pneg %p141
        %p273 = pneg %p165
        %p274 = pneg %p162
        %p275 = pneg %p191
        %p276 = pneg %p188
        %s277 = sand.u32 %s178, 1
        %s278 = sand.u32 %s178, 1
        %s279 = smul.addr %s278, 56
        %s280 = scalar_lea.vmem [#allocation2], %s279
        %s281 = smul.u32 7, %s18
        %s282 = ssub.s32 25, %s281
        %p283 = scmp.lt.s32.totalorder %s282, 7
        %s284 = scalar_select %p283, %s282, 7
        %s285 = smul.u32 128, %s284
        %p286 = scmp.lt.s32.totalorder %s281, 24
        %s287 = scalar_select %p286, %s281, 24
        %s288 = smul.addr %s287, 8
        %s289 = scalar_lea.vmem %s0, %s288
        %s290 = smul.u32 7, %s18
        %s291 = ssub.s32 25, %s290
        %p292 = scmp.lt.s32.totalorder %s291, 7
        %s293 = scalar_select %p292, %s291, 7
        %s294 = smul.u32 128, %s293
        %s295 = smul.u32 7, %s18
        %s296 = ssub.s32 25, %s295
        %p297 = scmp.lt.s32.totalorder %s296, 7
        %s298 = scalar_select %p297, %s296, 7
        %s299 = smul.u32 128, %s298
        %v300 = vld [vmem:[%s289] sm:$0xff]
        %v301 = vld [vmem:[%s289 + $0x8] sm:$0xff]
        %v302 = vld [vmem:[%s289 + $0x10] sm:$0xff]
        %v303 = vld [vmem:[%s289 + $0x18] sm:$0xff]
        %v304 = vld [vmem:[%s289 + $0x20] sm:$0xff]
        %v305 = vld [vmem:[%s289 + $0x28] sm:$0xff]
        %v306 = vld [vmem:[%s289 + $0x30] sm:$0xff]
        %v307 = vld [vmem:[%s1] sm:$0xff]
        %v308 = vld [vmem:[%s1 + $0x8] sm:$0xff]
        %v309 = vld [vmem:[%s1 + $0x10] sm:$0xff]
        %v310 = vld [vmem:[%s1 + $0x18] sm:$0xff]
        %v311 = vld [vmem:[%s2] sm:$0xff]
        %v312 = vld [vmem:[%s2 + $0x8] sm:$0xff]
        %v313 = vld [vmem:[%s2 + $0x10] sm:$0xff]
        %v314 = vld [vmem:[%s2 + $0x18] sm:$0xff]
        %316 = vset.pattern.permute.xlu0 0
        %317 = vperm.xlu0 %316, %v311
        %v318 = vpop.permute.xlu0 %317
        %321 = vset.pattern.permute.xlu0 0
        %322 = vperm.xlu0 %321, %v312
        %v323 = vpop.permute.xlu0 %322
        %326 = vset.pattern.permute.xlu0 0
        %327 = vperm.xlu0 %326, %v313
        %v328 = vpop.permute.xlu0 %327
        %331 = vset.pattern.permute.xlu0 0
        %332 = vperm.xlu0 %331, %v314
        %v333 = vpop.permute.xlu0 %332
        %vm335 = vcmask 130048
        %v337 = vsel %vm335, %v307, 0
        %v340 = vsel %vm335, %v308, 0
        %v343 = vsel %vm335, %v309, 0
        %v346 = vsel %vm335, %v310, 0
        %v349 = vsel %vm335, %v300, 0
        %v352 = vsel %vm335, %v301, 0
        %v355 = vsel %vm335, %v302, 0
        %v358 = vsel %vm335, %v303, 0
        %v361 = vsel %vm335, %v304, 0
        %v364 = vsel %vm335, %v305, 0
        %v367 = vsel %vm335, %v306, 0
        %369 = vmatprep.subr.mxu0 0.0
        %370 = vmatpush1.xpose.msra.mxu0 %v349
        %371 = vmatprep.subr.mxu0 0.0
        %372 = vmatpush1.xpose.msra.mxu0 %v352
        %373 = vmatprep.subr.mxu0 0.0
        %374 = vmatpush1.xpose.msra.mxu0 %v355
        %375 = vmatprep.subr.mxu0 0.0
        %376 = vmatpush1.xpose.msra.mxu0 %v358
        %377 = vmatprep.subr.mxu0 0.0
        %378 = vmatpush1.xpose.msra.mxu0 %v361
        %379 = vmatprep.subr.mxu0 0.0
        %380 = vmatpush1.xpose.msra.mxu0 %v364
        %381 = vmatprep.subr.mxu0 0.0
        %382 = vmatpush1.xpose.msra.mxu0 %v367
        %383 = vmatprep.subr.mxu0 0.0
        %384 = vmatpush1.xpose.msra.mxu0 0.0
        %385 = vmatprep.subr.mxu0 0.0
        %386 = vmatpush1.xpose.msra.mxu0 0.0
        %387 = vmatprep.subr.mxu0 0.0
        %388 = vmatpush1.xpose.msra.mxu0 0.0
        %389 = vmatprep.subr.mxu0 0.0
        %390 = vmatpush1.xpose.msra.mxu0 0.0
        %391 = vmatprep.subr.mxu0 0.0
        %392 = vmatpush1.xpose.msra.mxu0 0.0
        %393 = vmatprep.subr.mxu0 0.0
        %394 = vmatpush1.xpose.msra.mxu0 0.0
        %395 = vmatprep.subr.mxu0 0.0
        %396 = vmatpush1.xpose.msra.mxu0 0.0
        %397 = vmatprep.subr.mxu0 0.0
        %398 = vmatpush1.xpose.msra.mxu0 0.0
        %399 = vmatprep.subr.mxu0 0.0
        %400 = vmatpush1.xpose.msra.mxu0 0.0
        %401 = vmatprep.subr.mxu0 0.0
        %402 = vmatpush1.xpose.msra.mxu0 0.0
        %403 = vmatprep.subr.mxu0 0.0
        %404 = vmatpush1.xpose.msra.mxu0 0.0
        %405 = vmatprep.subr.mxu0 0.0
        %406 = vmatpush1.xpose.msra.mxu0 0.0
        %407 = vmatprep.subr.mxu0 0.0
        %408 = vmatpush1.xpose.msra.mxu0 0.0
        %409 = vmatprep.subr.mxu0 0.0
        %410 = vmatpush1.xpose.msra.mxu0 0.0
        %411 = vmatprep.subr.mxu0 0.0
        %412 = vmatpush1.xpose.msra.mxu0 0.0
        %413 = vmatprep.subr.mxu0 0.0
        %414 = vmatpush1.xpose.msra.mxu0 0.0
        %415 = vmatprep.subr.mxu0 0.0
        %416 = vmatpush1.xpose.msra.mxu0 0.0
        %417 = vmatprep.subr.mxu0 0.0
        %418 = vmatpush1.xpose.msra.mxu0 0.0
        %419 = vmatprep.subr.mxu0 0.0
        %420 = vmatpush1.xpose.msra.mxu0 0.0
        %421 = vmatprep.subr.mxu0 0.0
        %422 = vmatpush1.xpose.msra.mxu0 0.0
        %423 = vmatprep.subr.mxu0 0.0
        %424 = vmatpush1.xpose.msra.mxu0 0.0
        %425 = vmatprep.subr.mxu0 0.0
        %426 = vmatpush1.xpose.msra.mxu0 0.0
        %427 = vmatprep.subr.mxu0 0.0
        %428 = vmatpush1.xpose.msra.mxu0 0.0
        %429 = vmatprep.subr.mxu0 0.0
        %430 = vmatpush1.xpose.msra.mxu0 0.0
        %431 = vmatprep.subr.mxu0 0.0
        %432 = vmatpush1.xpose.msra.mxu0 0.0
        %433 = vmatprep.mubr.f32.mxu0 0.0
        %434 = vmatmul.mubr.f32.gmra.mrb[0].mxu0 %v337
        %v435 = vpop.f32.mrb[0].mxu0
        %v436 = vadd.f32 %v318, %v435
        %v437 = vpop.f32.mrb[0].mxu0
        %438 = vmatprep.mubr.f32.mxu0 0.0
        %439 = vmatmul.mubr.f32.gmra.mrb[0].mxu0 %v340
        %v440 = vpop.f32.mrb[0].mxu0
        %v441 = vadd.f32 %v323, %v440
        %v442 = vpop.f32.mrb[0].mxu0
        %443 = vmatprep.mubr.f32.mxu0 0.0
        %444 = vmatmul.mubr.f32.gmra.mrb[0].mxu0 %v343
        %v445 = vpop.f32.mrb[0].mxu0
        %v446 = vadd.f32 %v328, %v445
        %v447 = vpop.f32.mrb[0].mxu0
        %448 = vmatprep.mubr.f32.mxu0 0.0
        %449 = vmatmul.mubr.f32.gmra.mrb[0].mxu0 %v346
        %v450 = vpop.f32.mrb[0].mxu0
        %v451 = vadd.f32 %v333, %v450
        %v452 = vpop.f32.mrb[0].mxu0
        %453 = vdwg.mxu0
        %v454 = vmax.f32 %v436, 0.0
        %v455 = vmax.f32 %v441, 0.0
        %v456 = vmax.f32 %v446, 0.0
        %v457 = vmax.f32 %v451, 0.0
        %vm458 = vcmp.ne.f32.partialorder %v436, %v436
        %vm459 = vcmp.ne.f32.partialorder %v441, %v441
        %vm460 = vcmp.ne.f32.partialorder %v446, %v446
        %vm461 = vcmp.ne.f32.partialorder %v451, %v451
        %v462 = vadd.f32 %v436, 0.0
        %v463 = vadd.f32 %v441, 0.0
        %v464 = vadd.f32 %v446, 0.0
        %v465 = vadd.f32 %v451, 0.0
        %v466 = vand.u32 2147483647, %v436
        %v467 = vand.u32 2147483647, %v441
        %v468 = vand.u32 2147483647, %v446
        %v469 = vand.u32 2147483647, %v451
        %v470 = vsub.f32 0.0, %v466
        %v471 = vsub.f32 0.0, %v467
        %v472 = vsub.f32 0.0, %v468
        %v473 = vsub.f32 0.0, %v469
        %v474 = vmul.f32 %v470, 1.442695
        %v475 = vpow.pop %v474
        %v476 = vmul.f32 %v471, 1.442695
        %v477 = vpow.pop %v476
        %v478 = vmul.f32 %v472, 1.442695
        %v479 = vpow.pop %v478
        %v480 = vmul.f32 %v473, 1.442695
        %v481 = vpow.pop %v480
        %v482 = vadd.f32 %v475, 1.0
        %v483 = vlog2.pop %v482
        %v484 = vmul.f32 %v483, 0.6931472
        %v485 = vmul.f32 -0.5, %v475
        %v486 = vadd.f32 %v485, 1.0
        %v487 = vmul.f32 %v486, %v475
        %v488 = vand.u32 2147483647, %v475
        %vm489 = vcmp.lt.f32.partialorder %v488, 0.0004427343
        %v490 = vsel %vm489, %v487, %v484
        %v491 = vadd.f32 %v477, 1.0
        %v492 = vlog2.pop %v491
        %v493 = vmul.f32 %v492, 0.6931472
        %v494 = vmul.f32 -0.5, %v477
        %v495 = vadd.f32 %v494, 1.0
        %v496 = vmul.f32 %v495, %v477
        %v497 = vand.u32 2147483647, %v477
        %vm498 = vcmp.lt.f32.partialorder %v497, 0.0004427343
        %v499 = vsel %vm498, %v496, %v493
        %v500 = vadd.f32 %v479, 1.0
        %v501 = vlog2.pop %v500
        %v502 = vmul.f32 %v501, 0.6931472
        %v503 = vmul.f32 -0.5, %v479
        %v504 = vadd.f32 %v503, 1.0
        %v505 = vmul.f32 %v504, %v479
        %v506 = vand.u32 2147483647, %v479
        %vm507 = vcmp.lt.f32.partialorder %v506, 0.0004427343
        %v508 = vsel %vm507, %v505, %v502
        %v509 = vadd.f32 %v481, 1.0
        %v510 = vlog2.pop %v509
        %v511 = vmul.f32 %v510, 0.6931472
        %v512 = vmul.f32 -0.5, %v481
        %v513 = vadd.f32 %v512, 1.0
        %v514 = vmul.f32 %v513, %v481
        %v515 = vand.u32 2147483647, %v481
        %vm516 = vcmp.lt.f32.partialorder %v515, 0.0004427343
        %v517 = vsel %vm516, %v514, %v511
        %v518 = vadd.f32 %v454, %v490
        %v519 = vadd.f32 %v455, %v499
        %v520 = vadd.f32 %v456, %v508
        %v521 = vadd.f32 %v457, %v517
        %v522 = vsel %vm458, %v462, %v518
        %v523 = vsel %vm459, %v463, %v519
        %v524 = vsel %vm460, %v464, %v520
        %v525 = vsel %vm461, %v465, %v521
        %v526 = vld [vmem:[%s3] sm:$0xff]
        %v527 = vld [vmem:[%s3 + $0x8] sm:$0xff]
        %v528 = vld [vmem:[%s3 + $0x10] sm:$0xff]
        %v529 = vld [vmem:[%s3 + $0x18] sm:$0xff]
        %v530 = vld [vmem:[%s4] sm:$0xff]
        %v531 = vld [vmem:[%s4 + $0x8] sm:$0xff]
        %v532 = vld [vmem:[%s4 + $0x10] sm:$0xff]
        %v533 = vld [vmem:[%s4 + $0x18] sm:$0xff]
        %535 = vset.pattern.permute.xlu0 0
        %536 = vperm.xlu0 %535, %v530
        %v537 = vpop.permute.xlu0 %536
        %540 = vset.pattern.permute.xlu0 0
        %541 = vperm.xlu0 %540, %v531
        %v542 = vpop.permute.xlu0 %541
        %545 = vset.pattern.permute.xlu0 0
        %546 = vperm.xlu0 %545, %v532
        %v547 = vpop.permute.xlu0 %546
        %550 = vset.pattern.permute.xlu0 0
        %551 = vperm.xlu0 %550, %v533
        %v552 = vpop.permute.xlu0 %551
        %vm554 = vcmask 261120
        %v556 = vsel %vm554, %v526, 0
        %v559 = vsel %vm554, %v527, 0
        %v562 = vsel %vm554, %v528, 0
        %v565 = vsel %vm554, %v529, 0
        %567 = vmatprep.subr.mxu0 0.0
        %568 = vmatpush1.msra.mxu0 %v522
        %569 = vmatprep.subr.mxu0 0.0
        %570 = vmatpush1.msra.mxu0 %v523
        %571 = vmatprep.subr.mxu0 0.0
        %572 = vmatpush1.msra.mxu0 %v524
        %573 = vmatprep.subr.mxu0 0.0
        %574 = vmatpush1.msra.mxu0 %v525
        %575 = vmatprep.subr.mxu0 0.0
        %576 = vmatpush1.msra.mxu0 0.0
        %577 = vmatprep.subr.mxu0 0.0
        %578 = vmatpush1.msra.mxu0 0.0
        %579 = vmatprep.subr.mxu0 0.0
        %580 = vmatpush1.msra.mxu0 0.0
        %581 = vmatprep.subr.mxu0 0.0
        %582 = vmatpush1.msra.mxu0 0.0
        %583 = vmatprep.subr.mxu0 0.0
        %584 = vmatpush1.msra.mxu0 0.0
        %585 = vmatprep.subr.mxu0 0.0
        %586 = vmatpush1.msra.mxu0 0.0
        %587 = vmatprep.subr.mxu0 0.0
        %588 = vmatpush1.msra.mxu0 0.0
        %589 = vmatprep.subr.mxu0 0.0
        %590 = vmatpush1.msra.mxu0 0.0
        %591 = vmatprep.subr.mxu0 0.0
        %592 = vmatpush1.msra.mxu0 0.0
        %593 = vmatprep.subr.mxu0 0.0
        %594 = vmatpush1.msra.mxu0 0.0
        %595 = vmatprep.subr.mxu0 0.0
        %596 = vmatpush1.msra.mxu0 0.0
        %597 = vmatprep.subr.mxu0 0.0
        %598 = vmatpush1.msra.mxu0 0.0
        %599 = vmatprep.subr.mxu0 0.0
        %600 = vmatpush1.msra.mxu0 0.0
        %601 = vmatprep.subr.mxu0 0.0
        %602 = vmatpush1.msra.mxu0 0.0
        %603 = vmatprep.subr.mxu0 0.0
        %604 = vmatpush1.msra.mxu0 0.0
        %605 = vmatprep.subr.mxu0 0.0
        %606 = vmatpush1.msra.mxu0 0.0
        %607 = vmatprep.subr.mxu0 0.0
        %608 = vmatpush1.msra.mxu0 0.0
        %609 = vmatprep.subr.mxu0 0.0
        %610 = vmatpush1.msra.mxu0 0.0
        %611 = vmatprep.subr.mxu0 0.0
        %612 = vmatpush1.msra.mxu0 0.0
        %613 = vmatprep.subr.mxu0 0.0
        %614 = vmatpush1.msra.mxu0 0.0
        %615 = vmatprep.subr.mxu0 0.0
        %616 = vmatpush1.msra.mxu0 0.0
        %617 = vmatprep.subr.mxu0 0.0
        %618 = vmatpush1.msra.mxu0 0.0
        %619 = vmatprep.subr.mxu0 0.0
        %620 = vmatpush1.msra.mxu0 0.0
        %621 = vmatprep.subr.mxu0 0.0
        %622 = vmatpush1.msra.mxu0 0.0
        %623 = vmatprep.subr.mxu0 0.0
        %624 = vmatpush1.msra.mxu0 0.0
        %625 = vmatprep.subr.mxu0 0.0
        %626 = vmatpush1.msra.mxu0 0.0
        %627 = vmatprep.subr.mxu0 0.0
        %628 = vmatpush1.msra.mxu0 0.0
        %629 = vmatprep.subr.mxu0 0.0
        %630 = vmatpush1.msra.mxu0 0.0
        %631 = vmatprep.mubr.f32.mxu0 0.0
        %632 = vmatmul.mubr.f32.gmra.mrb[0].mxu0 %v556
        %v633 = vpop.f32.mrb[0].mxu0
        %v634 = vadd.f32 %v537, %v633
        %v635 = vpop.f32.mrb[0].mxu0
        %636 = vmatprep.mubr.f32.mxu0 0.0
        %637 = vmatmul.mubr.f32.gmra.mrb[0].mxu0 %v559
        %v638 = vpop.f32.mrb[0].mxu0
        %v639 = vadd.f32 %v542, %v638
        %v640 = vpop.f32.mrb[0].mxu0
        %641 = vmatprep.mubr.f32.mxu0 0.0
        %642 = vmatmul.mubr.f32.gmra.mrb[0].mxu0 %v562
        %v643 = vpop.f32.mrb[0].mxu0
        %v644 = vadd.f32 %v547, %v643
        %v645 = vpop.f32.mrb[0].mxu0
        %646 = vmatprep.mubr.f32.mxu0 0.0
        %647 = vmatmul.mubr.f32.gmra.mrb[0].mxu0 %v565
        %v648 = vpop.f32.mrb[0].mxu0
        %v649 = vadd.f32 %v552, %v648
        %v650 = vpop.f32.mrb[0].mxu0
        %651 = vdwg.mxu0
        %v652 = vmax.f32 %v634, 0.0
        %v653 = vmax.f32 %v639, 0.0
        %v654 = vmax.f32 %v644, 0.0
        %v655 = vmax.f32 %v649, 0.0
        %vm656 = vcmp.ne.f32.partialorder %v634, %v634
        %vm657 = vcmp.ne.f32.partialorder %v639, %v639
        %vm658 = vcmp.ne.f32.partialorder %v644, %v644
        %vm659 = vcmp.ne.f32.partialorder %v649, %v649
        %v660 = vadd.f32 %v634, 0.0
        %v661 = vadd.f32 %v639, 0.0
        %v662 = vadd.f32 %v644, 0.0
        %v663 = vadd.f32 %v649, 0.0
        %v664 = vand.u32 2147483647, %v634
        %v665 = vand.u32 2147483647, %v639
        %v666 = vand.u32 2147483647, %v644
        %v667 = vand.u32 2147483647, %v649
        %v668 = vsub.f32 0.0, %v664
        %v669 = vsub.f32 0.0, %v665
        %v670 = vsub.f32 0.0, %v666
        %v671 = vsub.f32 0.0, %v667
        %v672 = vmul.f32 %v668, 1.442695
        %v673 = vpow.pop %v672
        %v674 = vmul.f32 %v669, 1.442695
        %v675 = vpow.pop %v674
        %v676 = vmul.f32 %v670, 1.442695
        %v677 = vpow.pop %v676
        %v678 = vmul.f32 %v671, 1.442695
        %v679 = vpow.pop %v678
        %v680 = vadd.f32 %v673, 1.0
        %v681 = vlog2.pop %v680
        %v682 = vmul.f32 %v681, 0.6931472
        %v683 = vmul.f32 -0.5, %v673
        %v684 = vadd.f32 %v683, 1.0
        %v685 = vmul.f32 %v684, %v673
        %v686 = vand.u32 2147483647, %v673
        %vm687 = vcmp.lt.f32.partialorder %v686, 0.0004427343
        %v688 = vsel %vm687, %v685, %v682
        %v689 = vadd.f32 %v675, 1.0
        %v690 = vlog2.pop %v689
        %v691 = vmul.f32 %v690, 0.6931472
        %v692 = vmul.f32 -0.5, %v675
        %v693 = vadd.f32 %v692, 1.0
        %v694 = vmul.f32 %v693, %v675
        %v695 = vand.u32 2147483647, %v675
        %vm696 = vcmp.lt.f32.partialorder %v695, 0.0004427343
        %v697 = vsel %vm696, %v694, %v691
        %v698 = vadd.f32 %v677, 1.0
        %v699 = vlog2.pop %v698
        %v700 = vmul.f32 %v699, 0.6931472
        %v701 = vmul.f32 -0.5, %v677
        %v702 = vadd.f32 %v701, 1.0
        %v703 = vmul.f32 %v702, %v677
        %v704 = vand.u32 2147483647, %v677
        %vm705 = vcmp.lt.f32.partialorder %v704, 0.0004427343
        %v706 = vsel %vm705, %v703, %v700
        %v707 = vadd.f32 %v679, 1.0
        %v708 = vlog2.pop %v707
        %v709 = vmul.f32 %v708, 0.6931472
        %v710 = vmul.f32 -0.5, %v679
        %v711 = vadd.f32 %v710, 1.0
        %v712 = vmul.f32 %v711, %v679
        %v713 = vand.u32 2147483647, %v679
        %vm714 = vcmp.lt.f32.partialorder %v713, 0.0004427343
        %v715 = vsel %vm714, %v712, %v709
        %v716 = vadd.f32 %v652, %v688
        %v717 = vadd.f32 %v653, %v697
        %v718 = vadd.f32 %v654, %v706
        %v719 = vadd.f32 %v655, %v715
        %v720 = vsel %vm656, %v660, %v716
        %v721 = vsel %vm657, %v661, %v717
        %v722 = vsel %vm658, %v662, %v718
        %v723 = vsel %vm659, %v663, %v719
        %v724 = vld [vmem:[%s5] sm:$0xff]
        %v725 = vld [vmem:[%s5 + $0x8] sm:$0xff]
        %v726 = vld [vmem:[%s5 + $0x10] sm:$0xff]
        %v727 = vld [vmem:[%s5 + $0x18] sm:$0xff]
        %v728 = vld [vmem:[%s6] sm:$0x1]
        %v730 = vlaneseq
        %v731 = vshrl.u32 %v730, 7
        %v732 = vsub.s32 0, %v731
        %v733 = vrot.slane %v728, %v732
        %735 = vxpose.xlu0.b32.start [1/16] %v720, 128
        %736 = vxpose.xlu0.b32.cont [2/16] %v721, 128
        %737 = vxpose.xlu0.b32.cont [3/16] %v722, 128
        %738 = vxpose.xlu0.b32.cont [4/16] %v723, 128
        %739 = vxpose.xlu0.b32.cont [5/16] 0.0, 128
        %740 = vxpose.xlu0.b32.cont [6/16] 0.0, 128
        %741 = vxpose.xlu0.b32.cont [7/16] 0.0, 128
        %742 = vxpose.xlu0.b32.cont [8/16] 0.0, 128
        %743 = vxpose.xlu0.b32.cont [9/16] 0.0, 128
        %744 = vxpose.xlu0.b32.cont [10/16] 0.0, 128
        %745 = vxpose.xlu0.b32.cont [11/16] 0.0, 128
        %746 = vxpose.xlu0.b32.cont [12/16] 0.0, 128
        %747 = vxpose.xlu0.b32.cont [13/16] 0.0, 128
        %748 = vxpose.xlu0.b32.cont [14/16] 0.0, 128
        %749 = vxpose.xlu0.b32.cont [15/16] 0.0, 128
        %750 = vxpose.xlu0.b32.end [16/16] 0.0, 128
        %v751 = vpop.trf.xlu0
        %v752 = vpop.trf.xlu0
        %v753 = vpop.trf.xlu0
        %v754 = vpop.trf.xlu0
        %v755 = vpop.trf.xlu0
        %v756 = vpop.trf.xlu0
        %v757 = vpop.trf.xlu0
        %v758 = vpop.trf.xlu0
        %v759 = vpop.trf.xlu0
        %v760 = vpop.trf.xlu0
        %v761 = vpop.trf.xlu0
        %v762 = vpop.trf.xlu0
        %v763 = vpop.trf.xlu0
        %v764 = vpop.trf.xlu0
        %v765 = vpop.trf.xlu0
        %v766 = vpop.trf.xlu0
        %v768 = vsel %vm554, %v751, 0
        %v771 = vsel %vm554, %v752, 0
        %v774 = vsel %vm554, %v753, 0
        %v777 = vsel %vm554, %v754, 0
        %v780 = vsel %vm554, %v755, 0
        %v783 = vsel %vm554, %v756, 0
        %v786 = vsel %vm554, %v757, 0
        %788 = vmatprep.subr.mxu0 0.0
        %789 = vmatpush1.msra.mxu0 %v724
        %790 = vmatprep.subr.mxu0 0.0
        %791 = vmatpush1.msra.mxu0 %v725
        %792 = vmatprep.subr.mxu0 0.0
        %793 = vmatpush1.msra.mxu0 %v726
        %794 = vmatprep.subr.mxu0 0.0
        %795 = vmatpush1.msra.mxu0 %v727
        %796 = vmatprep.subr.mxu0 0.0
        %797 = vmatpush1.msra.mxu0 0.0
        %798 = vmatprep.subr.mxu0 0.0
        %799 = vmatpush1.msra.mxu0 0.0
        %800 = vmatprep.subr.mxu0 0.0
        %801 = vmatpush1.msra.mxu0 0.0
        %802 = vmatprep.subr.mxu0 0.0
        %803 = vmatpush1.msra.mxu0 0.0
        %804 = vmatprep.subr.mxu0 0.0
        %805 = vmatpush1.msra.mxu0 0.0
        %806 = vmatprep.subr.mxu0 0.0
        %807 = vmatpush1.msra.mxu0 0.0
        %808 = vmatprep.subr.mxu0 0.0
        %809 = vmatpush1.msra.mxu0 0.0
        %810 = vmatprep.subr.mxu0 0.0
        %811 = vmatpush1.msra.mxu0 0.0
        %812 = vmatprep.subr.mxu0 0.0
        %813 = vmatpush1.msra.mxu0 0.0
        %814 = vmatprep.subr.mxu0 0.0
        %815 = vmatpush1.msra.mxu0 0.0
        %816 = vmatprep.subr.mxu0 0.0
        %817 = vmatpush1.msra.mxu0 0.0
        %818 = vmatprep.subr.mxu0 0.0
        %819 = vmatpush1.msra.mxu0 0.0
        %820 = vmatprep.subr.mxu0 0.0
        %821 = vmatpush1.msra.mxu0 0.0
        %822 = vmatprep.subr.mxu0 0.0
        %823 = vmatpush1.msra.mxu0 0.0
        %824 = vmatprep.subr.mxu0 0.0
        %825 = vmatpush1.msra.mxu0 0.0
        %826 = vmatprep.subr.mxu0 0.0
        %827 = vmatpush1.msra.mxu0 0.0
        %828 = vmatprep.subr.mxu0 0.0
        %829 = vmatpush1.msra.mxu0 0.0
        %830 = vmatprep.subr.mxu0 0.0
        %831 = vmatpush1.msra.mxu0 0.0
        %832 = vmatprep.subr.mxu0 0.0
        %833 = vmatpush1.msra.mxu0 0.0
        %834 = vmatprep.subr.mxu0 0.0
        %835 = vmatpush1.msra.mxu0 0.0
        %836 = vmatprep.subr.mxu0 0.0
        %837 = vmatpush1.msra.mxu0 0.0
        %838 = vmatprep.subr.mxu0 0.0
        %839 = vmatpush1.msra.mxu0 0.0
        %840 = vmatprep.subr.mxu0 0.0
        %841 = vmatpush1.msra.mxu0 0.0
        %842 = vmatprep.subr.mxu0 0.0
        %843 = vmatpush1.msra.mxu0 0.0
        %844 = vmatprep.subr.mxu0 0.0
        %845 = vmatpush1.msra.mxu0 0.0
        %846 = vmatprep.subr.mxu0 0.0
        %847 = vmatpush1.msra.mxu0 0.0
        %848 = vmatprep.subr.mxu0 0.0
        %849 = vmatpush1.msra.mxu0 0.0
        %850 = vmatprep.subr.mxu0 0.0
        %851 = vmatpush1.msra.mxu0 0.0
        %852 = vmatprep.mubr.f32.mxu0 0.0
        %853 = vmatmul.mubr.f32.gmra.mrb[0].mxu0 %v768
        %v854 = vpop.f32.mrb[0].mxu0
        %v855 = vadd.f32 %v733, %v854
        %v856 = vpop.f32.mrb[0].mxu0
        %857 = vmatprep.mubr.f32.mxu0 0.0
        %858 = vmatmul.mubr.f32.gmra.mrb[0].mxu0 %v771
        %v859 = vpop.f32.mrb[0].mxu0
        %v860 = vadd.f32 %v733, %v859
        %v861 = vpop.f32.mrb[0].mxu0
        %862 = vmatprep.mubr.f32.mxu0 0.0
        %863 = vmatmul.mubr.f32.gmra.mrb[0].mxu0 %v774
        %v864 = vpop.f32.mrb[0].mxu0
        %v865 = vadd.f32 %v733, %v864
        %v866 = vpop.f32.mrb[0].mxu0
        %867 = vmatprep.mubr.f32.mxu0 0.0
        %868 = vmatmul.mubr.f32.gmra.mrb[0].mxu0 %v777
        %v869 = vpop.f32.mrb[0].mxu0
        %v870 = vadd.f32 %v733, %v869
        %v871 = vpop.f32.mrb[0].mxu0
        %872 = vmatprep.mubr.f32.mxu0 0.0
        %873 = vmatmul.mubr.f32.gmra.mrb[0].mxu0 %v780
        %v874 = vpop.f32.mrb[0].mxu0
        %v875 = vadd.f32 %v733, %v874
        %v876 = vpop.f32.mrb[0].mxu0
        %877 = vmatprep.mubr.f32.mxu0 0.0
        %878 = vmatmul.mubr.f32.gmra.mrb[0].mxu0 %v783
        %v879 = vpop.f32.mrb[0].mxu0
        %v880 = vadd.f32 %v733, %v879
        %v881 = vpop.f32.mrb[0].mxu0
        %882 = vmatprep.mubr.f32.mxu0 0.0
        %883 = vmatmul.mubr.f32.gmra.mrb[0].mxu0 %v786
        %v884 = vpop.f32.mrb[0].mxu0
        %v885 = vadd.f32 %v733, %v884
        %v886 = vpop.f32.mrb[0].mxu0
        %887 = vdwg.mxu0
        %vm888 = vcmask 64512
        %889 = vst.msk [vmem:[%s280] sm:$0xff] %vm888, %v855
        %890 = vst.msk [vmem:[%s280 + $0x8] sm:$0xff] %vm888, %v860
        %891 = vst.msk [vmem:[%s280 + $0x10] sm:$0xff] %vm888, %v865
        %892 = vst.msk [vmem:[%s280 + $0x18] sm:$0xff] %vm888, %v870
        %893 = vst.msk [vmem:[%s280 + $0x20] sm:$0xff] %vm888, %v875
        %894 = vst.msk [vmem:[%s280 + $0x28] sm:$0xff] %vm888, %v880
        %895 = vst.msk [vmem:[%s280 + $0x30] sm:$0xff] %vm888, %v885
        %s896 = sand.u32 %s178, 1
        %s897 = sand.u32 %s178, 1
        %s898 = smul.addr %s897, 56
        %s899 = scalar_lea.vmem [#allocation2], %s898
        // Predicated region
        $region49: #{tpu_custom_call.1} parent=47 // pred_check
          %p900 = pneg %p188
        $region50: #{tpu_custom_call.1} parent=47 // pred_check_branch
          %902 = sbr.rel (%p900) target = $region52
        $region51: #{tpu_custom_call.1} parent=47 // pred_region
          %s903 = smul.u32 7, %s18
          %s904 = ssub.s32 25, %s903
          %p905 = scmp.lt.s32.totalorder %s904, 7
          %s906 = scalar_select %p905, %s904, 7
          %s907 = smul.u32 128, %s906
          %p908 = scmp.ne.s32.totalorder 0, %s907
          %s909 = smul.addr %s903, 8
          %s910 = scalar_lea.vmem %s7, %s909
          // Predicated region
          $region53: #{tpu_custom_call.1} parent=51 // pred_check
            %p911 = pneg %p908
          $region54: #{tpu_custom_call.1} parent=51 // pred_check_branch
            %913 = sbr.rel (%p911) target = $region56
          $region55: #{tpu_custom_call.1} parent=51 // pred_region
            // Predicated region
            $region57: #{tpu_custom_call.1} parent=55 // pred_check
              _
            $region58: #{tpu_custom_call.1} parent=55 // pred_check_branch
              %915 = sbr.rel (0) target = $region60
            $region59: #{tpu_custom_call.1} parent=55 // pred_region
              // Predicated region
              $region79: #{tpu_custom_call.1} parent=59 // pred_check
                _
              $region80: #{tpu_custom_call.1} parent=59 // pred_check_branch
                %977 = sbr.rel (0) target = $region82
              $region81: #{tpu_custom_call.1} parent=59 // pred_region
                %s978 = sdiv.u32.pop %s906, 7
                %s979 = srem.u32.pop %s906, 7
                // While loop
                $region83: #{tpu_custom_call.1} parent=81 // loop_pre_header
                  _
                $region84: #{tpu_custom_call.1} parent=81 // loop_header
                  %s981 = sphi 0, %s983
                  %p982 = scmp.ge.s32.totalorder %s981, %s978
                  %s986 = sphi 0, %s1005
                  %s987 = sphi %s899, %s1008
                  %s988 = sphi %s910, %s1009
                $region85: #{tpu_custom_call.1} parent=81 // loop_header_branch
                  %985 = sbr.rel (%p982) target = $region89
                $region86: #{tpu_custom_call.1} parent=81 // loop_body
                  %v989 = vld [vmem:[%s987] sm:$0xff]
                  %990 = vst [vmem:[%s988] sm:$0xff] %v989
                  %v991 = vld [vmem:[%s987 + $0x8] sm:$0xff]
                  %992 = vst [vmem:[%s988 + $0x8] sm:$0xff] %v991
                  %v993 = vld [vmem:[%s987 + $0x10] sm:$0xff]
                  %994 = vst [vmem:[%s988 + $0x10] sm:$0xff] %v993
                  %v995 = vld [vmem:[%s987 + $0x18] sm:$0xff]
                  %996 = vst [vmem:[%s988 + $0x18] sm:$0xff] %v995
                  %v997 = vld [vmem:[%s987 + $0x20] sm:$0xff]
                  %998 = vst [vmem:[%s988 + $0x20] sm:$0xff] %v997
                  %v999 = vld [vmem:[%s987 + $0x28] sm:$0xff]
                  %1000 = vst [vmem:[%s988 + $0x28] sm:$0xff] %v999
                  %v1001 = vld [vmem:[%s987 + $0x30] sm:$0xff]
                  %1002 = vst [vmem:[%s988 + $0x30] sm:$0xff] %v1001
                  %s1003 = sadd.s32 1, %s986
                  %p1004 = scmp.ge.s32.totalorder %s1003, %s978
                  %s1005 = scalar_select %p1004, 0, %s1003
                  %s1006 = smul.u32 %s1005, 56
                  %s1007 = smul.u32 %s1005, 56
                  %s1008 = scalar_lea.vmem %s899, %s1006 [#allocation2]
                  %s1009 = scalar_lea.vmem %s910, %s1007
                $region87: #{tpu_custom_call.1} parent=81 // loop_footer
                  %s983 = sadd.s32 %s981, 1
                $region88: #{tpu_custom_call.1} parent=81 // loop_footer_branch
                  %980 = sbr.rel target = $region84
                $region89: #{tpu_custom_call.1} parent=81 // loop_exit
                  _
                %s1010 = sdiv.u32.pop %s906, 7
                %s1011 = srem.u32.pop %s906, 7
                %s1012 = smul.u32 %s1010, 7
                %s1013 = smul.u32 8, %s1012
                %s1014 = scalar_lea.vmem %s899, %s1013 [#allocation2]
                %s1015 = smul.u32 8, %s1012
                %s1016 = scalar_lea.vmem %s910, %s1015
                // While loop
                $region90: #{tpu_custom_call.1} parent=81 // loop_pre_header
                  _
                $region91: #{tpu_custom_call.1} parent=81 // loop_header
                  %s1018 = sphi 0, %s1020
                  %p1019 = scmp.ge.s32.totalorder %s1018, %s1011
                  %s1023 = sphi 0, %s1030
                  %s1024 = sphi %s1014, %s1033
                  %s1025 = sphi %s1016, %s1034
                $region92: #{tpu_custom_call.1} parent=81 // loop_header_branch
                  %1022 = sbr.rel (%p1019) target = $region96
                $region93: #{tpu_custom_call.1} parent=81 // loop_body
                  %v1026 = vld [vmem:[%s1024] sm:$0xff]
                  %1027 = vst [vmem:[%s1025] sm:$0xff] %v1026
                  %s1028 = sadd.s32 1, %s1023
                  %p1029 = scmp.ge.s32.totalorder %s1028, %s1011
                  %s1030 = scalar_select %p1029, 0, %s1028
                  %s1031 = smul.u32 %s1030, 8
                  %s1032 = smul.u32 %s1030, 8
                  %s1033 = scalar_lea.vmem %s1014, %s1031 [#allocation2]
                  %s1034 = scalar_lea.vmem %s1016, %s1032
                $region94: #{tpu_custom_call.1} parent=81 // loop_footer
                  %s1020 = sadd.s32 %s1018, 1
                $region95: #{tpu_custom_call.1} parent=81 // loop_footer_branch
                  %1017 = sbr.rel target = $region91
                $region96: #{tpu_custom_call.1} parent=81 // loop_exit
                  _
              $region82: #{tpu_custom_call.1} parent=59 // pred_fallthru
                _
              // Predicated region
              $region97: #{tpu_custom_call.1} parent=59 // pred_check
                _
              $region98: #{tpu_custom_call.1} parent=59 // pred_check_branch
                %1036 = sbr.rel target = $region100
              $region99: #{tpu_custom_call.1} parent=59 // pred_region
                _
              $region100: #{tpu_custom_call.1} parent=59 // pred_fallthru
                _
            $region60: #{tpu_custom_call.1} parent=55 // pred_fallthru
              _
            // Predicated region
            $region61: #{tpu_custom_call.1} parent=55 // pred_check
              _
            $region62: #{tpu_custom_call.1} parent=55 // pred_check_branch
              %917 = sbr.rel target = $region64
            $region63: #{tpu_custom_call.1} parent=55 // pred_region
              %s919 = sdiv.u32.pop %s906, 7
              %s920 = srem.u32.pop %s906, 7
              // While loop
              $region65: #{tpu_custom_call.1} parent=63 // loop_pre_header
                _
              $region66: #{tpu_custom_call.1} parent=63 // loop_header
                %s922 = sphi 0, %s924
                %p923 = scmp.ge.s32.totalorder %s922, %s919
                %s927 = sphi 0, %s946
                %s928 = sphi %s899, %s949
                %s929 = sphi %s910, %s950
              $region67: #{tpu_custom_call.1} parent=63 // loop_header_branch
                %926 = sbr.rel (%p923) target = $region71
              $region68: #{tpu_custom_call.1} parent=63 // loop_body
                %v930 = vld [vmem:[%s928] sm:$0xff]
                %931 = vst [vmem:[%s929] sm:$0xff] %v930
                %v932 = vld [vmem:[%s928 + $0x8] sm:$0xff]
                %933 = vst [vmem:[%s929 + $0x8] sm:$0xff] %v932
                %v934 = vld [vmem:[%s928 + $0x10] sm:$0xff]
                %935 = vst [vmem:[%s929 + $0x10] sm:$0xff] %v934
                %v936 = vld [vmem:[%s928 + $0x18] sm:$0xff]
                %937 = vst [vmem:[%s929 + $0x18] sm:$0xff] %v936
                %v938 = vld [vmem:[%s928 + $0x20] sm:$0xff]
                %939 = vst [vmem:[%s929 + $0x20] sm:$0xff] %v938
                %v940 = vld [vmem:[%s928 + $0x28] sm:$0xff]
                %941 = vst [vmem:[%s929 + $0x28] sm:$0xff] %v940
                %v942 = vld [vmem:[%s928 + $0x30] sm:$0xff]
                %943 = vst [vmem:[%s929 + $0x30] sm:$0xff] %v942
                %s944 = sadd.s32 1, %s927
                %p945 = scmp.ge.s32.totalorder %s944, %s919
                %s946 = scalar_select %p945, 0, %s944
                %s947 = smul.u32 %s946, 56
                %s948 = smul.u32 %s946, 56
                %s949 = scalar_lea.vmem %s899, %s947 [#allocation2]
                %s950 = scalar_lea.vmem %s910, %s948
              $region69: #{tpu_custom_call.1} parent=63 // loop_footer
                %s924 = sadd.s32 %s922, 1
              $region70: #{tpu_custom_call.1} parent=63 // loop_footer_branch
                %921 = sbr.rel target = $region66
              $region71: #{tpu_custom_call.1} parent=63 // loop_exit
                _
              %s951 = sdiv.u32.pop %s906, 7
              %s952 = srem.u32.pop %s906, 7
              %s953 = smul.u32 %s951, 7
              %s954 = smul.u32 8, %s953
              %s955 = scalar_lea.vmem %s899, %s954 [#allocation2]
              %s956 = smul.u32 8, %s953
              %s957 = scalar_lea.vmem %s910, %s956
              // While loop
              $region72: #{tpu_custom_call.1} parent=63 // loop_pre_header
                _
              $region73: #{tpu_custom_call.1} parent=63 // loop_header
                %s959 = sphi 0, %s961
                %p960 = scmp.ge.s32.totalorder %s959, %s952
                %s964 = sphi 0, %s971
                %s965 = sphi %s955, %s974
                %s966 = sphi %s957, %s975
              $region74: #{tpu_custom_call.1} parent=63 // loop_header_branch
                %963 = sbr.rel (%p960) target = $region78
              $region75: #{tpu_custom_call.1} parent=63 // loop_body
                %v967 = vld [vmem:[%s965] sm:$0xff]
                %968 = vst [vmem:[%s966] sm:$0xff] %v967
                %s969 = sadd.s32 1, %s964
                %p970 = scmp.ge.s32.totalorder %s969, %s952
                %s971 = scalar_select %p970, 0, %s969
                %s972 = smul.u32 %s971, 8
                %s973 = smul.u32 %s971, 8
                %s974 = scalar_lea.vmem %s955, %s972 [#allocation2]
                %s975 = scalar_lea.vmem %s957, %s973
              $region76: #{tpu_custom_call.1} parent=63 // loop_footer
                %s961 = sadd.s32 %s959, 1
              $region77: #{tpu_custom_call.1} parent=63 // loop_footer_branch
                %958 = sbr.rel target = $region73
              $region78: #{tpu_custom_call.1} parent=63 // loop_exit
                _
            $region64: #{tpu_custom_call.1} parent=55 // pred_fallthru
              _
          $region56: #{tpu_custom_call.1} parent=51 // pred_fallthru
            _
          %1037 = vnop
        $region52: #{tpu_custom_call.1} parent=47 // pred_fallthru
          _
      $region48: #{tpu_custom_call.1} parent=5 // pred_fallthru
        _
      %p1038 = scmp.le.s32.totalorder 2, %s13
      // Predicated region
      $region101: #{tpu_custom_call.1} parent=5 // pred_check
        %p1039 = pneg %p1038
      $region102: #{tpu_custom_call.1} parent=5 // pred_check_branch
        %1041 = sbr.rel (%p1039) target = $region104
      $region103: #{tpu_custom_call.1} parent=5 // pred_region
        %s1042 = ssub.s32 %s13, 2
        // Predicated region
        $region105: #{tpu_custom_call.1} parent=103 // pred_check
          %p1043 = pneg %p194
        $region106: #{tpu_custom_call.1} parent=103 // pred_check_branch
          %1045 = sbr.rel (%p1043) target = $region108
        $region107: #{tpu_custom_call.1} parent=103 // pred_region
          %s1046 = sand.u32 %s179, 1
          %s1047 = sand.u32 %s179, 1
          %s1048 = smul.addr %s1047, 56
          %s1049 = scalar_lea.vmem [#allocation2], %s1048
        $region108: #{tpu_custom_call.1} parent=103 // pred_fallthru
          _
      $region104: #{tpu_custom_call.1} parent=5 // pred_fallthru
        _
    $region6: #{tpu_custom_call.1} parent=1 // loop_footer
      %s17 = sadd.s32 1, %s13
    $region7: #{tpu_custom_call.1} parent=1 // loop_footer_branch
      %12 = sbr.rel target = $region3
    $region8: #{tpu_custom_call.1} parent=1 // loop_exit
      _

</llo_original>
